<compile_context>
chip_gen: v7x
topology: tpu7x:2x2x1
jax: 0.10.0
libtpu: 0.0.40
codegen_flags: <defaults>
</compile_context>

<pallas_src>
import jax
import jax.numpy as jnp
from jax.experimental import pallas as pl
from jax.experimental.pallas import tpu as pltpu

_SUBLANE = 8


def _round_up(n, m):
    return ((n + m - 1) // m) * m


def _make_chain_kernel(num_linear, relu_flags, input_relu):
    """Kernel refs: x, (w0, b0), (w1, b1), ..., out.

    Weights arrive already transposed to (in, out): the matmul is a plain
    `h @ W` feeding the MXU directly (no in-kernel transpose).  Matmul
    operands are in the weight dtype (f32 or bf16); accumulation, bias add
    and ReLU are f32.
    """

    def kernel(*refs):
        x_ref = refs[0]
        out_ref = refs[-1]
        h = x_ref[...]
        if input_relu:
            h = jnp.maximum(h.astype(jnp.float32), 0.0)
        for i in range(num_linear):
            w_ref = refs[1 + 2 * i]
            b_ref = refs[2 + 2 * i]
            lhs = h.astype(w_ref.dtype)          # bf16 MXU feed on v6e/v7x
            h = jnp.dot(lhs, w_ref[...], preferred_element_type=jnp.float32)
            h = h + b_ref[...].astype(jnp.float32)   # bias/ReLU in f32 (v5e-safe)
            if relu_flags[i]:
                h = jnp.maximum(h, 0.0)
        out_ref[...] = h.astype(out_ref.dtype)

    return kernel


def prepare_custom_layer(layers, feed_dtype=jnp.float32):
    """One-time parameter prep (hoisted out of the forward pass).

    layers: ordered sub-layers, each either
              ("linear", W, b)  with W: (out, in) PyTorch layout, b: (out,)
              ("relu",)
    Returns (meta, params): params alternates W^T as (in, out) in feed_dtype
    and b as (1, out) f32, with no padding.
    """
    # TODO(synk): only Linear and ReLU sub-layers are translated; other
    # nn.Module sub-layer types would need their own kernel body.
    input_relu = False
    lin = []  # [W (out,in), b (out,), relu_after]
    for layer in layers:
        kind = layer[0]
        if kind == "linear":
            _, w, b = layer
            lin.append([w, b, False])
        elif kind == "relu":
            if lin:
                lin[-1][2] = True
            else:
                input_relu = True
        else:
            raise NotImplementedError(f"unsupported sub-layer: {kind}")
    assert lin, "CustomLayer instantiation must contain at least one Linear"

    dims = [lin[0][0].shape[1]] + [w.shape[0] for (w, _, _) in lin]
    params = []
    for i, (w, b, _) in enumerate(lin):
        assert w.shape == (dims[i + 1], dims[i])
        assert b.shape == (dims[i + 1],)
        params.append(jnp.asarray(w.T, feed_dtype))              # (in, out)
        params.append(jnp.asarray(b, jnp.float32).reshape(1, -1))  # (1, out)

    meta = dict(dims=tuple(dims),
                relu_flags=tuple(r for (_, _, r) in lin),
                input_relu=input_relu)
    return meta, tuple(params)


def custom_layer_forward(x, meta, params):
    """Pallas implementation of CustomLayer.forward on prepared params.

    x: (batch, in_features).  Returns (batch, last_out), dtype of x.
    """
    B, H0 = x.shape
    dims = meta["dims"]
    assert H0 == dims[0]
    out_dim = dims[-1]
    num_linear = len(dims) - 1

    # Batch padded only to the sublane quantum (8); feature dims stay natural.
    B_pad = _round_up(B, _SUBLANE)
    if B_pad != B:
        x = jnp.pad(x, ((0, B_pad - B), (0, 0)))

    # Large batch tile amortizes the ~0.35us per-grid-step overhead; cdiv grid
    # so an unlucky batch never costs a full extra tile of dead DMA/compute.
    tm = min(512, B_pad)
    # v7x has two TensorCores: make sure the "parallel" axis has >=2 steps.
    if B_pad // tm < 2 and B_pad >= 2 * _SUBLANE:
        tm = _round_up(pl.cdiv(B_pad, 2), _SUBLANE)
    grid = (pl.cdiv(B_pad, tm),)

    in_specs = [pl.BlockSpec((tm, H0), lambda i: (i, 0))]
    for li in range(num_linear):
        w = params[2 * li]
        b = params[2 * li + 1]
        # Full-array blocks, constant index map -> fetched once, not per step.
        in_specs.append(pl.BlockSpec(w.shape, lambda i: (0, 0)))
        in_specs.append(pl.BlockSpec(b.shape, lambda i: (0, 0)))

    out_spec = pl.BlockSpec((tm, out_dim), lambda i: (i, 0))
    out_shape = jax.ShapeDtypeStruct((B_pad, out_dim), x.dtype)

    kernel = _make_chain_kernel(num_linear, meta["relu_flags"],
                                meta["input_relu"])

    # Explicit VMEM budget from actual block sizes (v7x only has 64 MiB).
    def nbytes(shape, dtype):
        n = 1
        for d in shape:
            n *= d
        return n * jnp.dtype(dtype).itemsize

    vmem_need = 2 * (nbytes((tm, H0), x.dtype) + nbytes((tm, out_dim), x.dtype))
    for p in params:
        vmem_need += 2 * p.size * p.dtype.itemsize
    vmem_need += 4 * tm * max(dims) * 4  # f32 intermediates headroom
    vmem_limit = int(min(48 * 1024 * 1024, max(2 * vmem_need, 8 * 1024 * 1024)))

    out = pl.pallas_call(
        kernel,
        out_shape=out_shape,
        grid=grid,
        in_specs=in_specs,
        out_specs=out_spec,
        compiler_params=pltpu.CompilerParams(
            dimension_semantics=("parallel",),
            vmem_limit_bytes=vmem_limit,
        ),
    )(x, *params)

    return out[:B] if B_pad != B else out


def _init_linear_params(key, in_features, out_features, dtype=jnp.float32):
    """Deterministic nn.Linear-style init (uniform in +/- 1/sqrt(in))."""
    kw, kb = jax.random.split(key)
    bound = 1.0 / (in_features ** 0.5)
    w = jax.random.uniform(kw, (out_features, in_features), dtype,
                           minval=-bound, maxval=bound)
    b = jax.random.uniform(kb, (out_features,), dtype,
                           minval=-bound, maxval=bound)
    return w, b


if __name__ == "__main__":
    key = jax.random.PRNGKey(0)
    k_x, k1, k2, k3 = jax.random.split(key, 4)

    batch, hidden = 8, 32
    dims = (hidden, 64, 48, 16)

    x = jax.random.normal(k_x, (batch, hidden), jnp.float32)

    w1, b1 = _init_linear_params(k1, dims[0], dims[1])
    w2, b2 = _init_linear_params(k2, dims[1], dims[2])
    w3, b3 = _init_linear_params(k3, dims[2], dims[3])

    # CustomLayer with sub-layers added via add_layer():
    # Linear -> ReLU -> Linear -> ReLU -> Linear
    layers = [("linear", w1, b1), ("relu",),
              ("linear", w2, b2), ("relu",),
              ("linear", w3, b3)]

    # Pure-JAX reference of the same sequential forward pass.
    ref = x
    for layer in layers:
        if layer[0] == "linear":
            _, w, b = layer
            ref = ref @ w.T + b
        else:
            ref = jnp.maximum(ref, 0.0)

    # f32 feed: exact path.
    meta, params_f32 = prepare_custom_layer(layers, feed_dtype=jnp.float32)
    out_f32 = jax.block_until_ready(custom_layer_forward(x, meta, params_f32))
    assert out_f32.shape == (batch, dims[-1])
    assert jnp.allclose(out_f32, ref, atol=1e-5, rtol=1e-5)

    # bf16 MXU feed (recommended on v6e/v7x): halves x/weight HBM bytes;
    # accumulation, bias and ReLU stay f32 inside the kernel.
    meta_bf, params_bf16 = prepare_custom_layer(layers, feed_dtype=jnp.bfloat16)
    out_bf16 = jax.block_until_ready(
        custom_layer_forward(x.astype(jnp.bfloat16), meta_bf, params_bf16))
    assert out_bf16.shape == (batch, dims[-1])
    assert jnp.allclose(out_bf16.astype(jnp.float32), ref, atol=7e-2, rtol=7e-2)

    print("KERNEL_OK")
</pallas_src>

<mosaic_0001>
module attributes {stable_mosaic.version = 11 : i64} {
  func.func @kernel(%arg0: i32, %arg1: memref<8x32xf32, #tpu.memory_space<vmem>>, %arg2: memref<32x64xf32, #tpu.memory_space<vmem>>, %arg3: memref<1x64xf32, #tpu.memory_space<vmem>>, %arg4: memref<64x48xf32, #tpu.memory_space<vmem>>, %arg5: memref<1x48xf32, #tpu.memory_space<vmem>>, %arg6: memref<48x16xf32, #tpu.memory_space<vmem>>, %arg7: memref<1x16xf32, #tpu.memory_space<vmem>>, %arg8: memref<8x16xf32, #tpu.memory_space<vmem>>) attributes {dimension_semantics = [#tpu.dimension_semantics<parallel>], iteration_bounds = array<i64: 1>, scalar_prefetch = 0 : i64, scratch_operands = 0 : i64, tpu.core_type = #tpu.core_type<tc>, window_params = [{transform_indices = @transform_0, window_bounds = array<i64: 8, 32>}, {pipeline_mode = #tpu.pipeline_mode<synchronous>, transform_indices = @transform_1, window_bounds = array<i64: 32, 64>}, {pipeline_mode = #tpu.pipeline_mode<synchronous>, transform_indices = @transform_2, window_bounds = array<i64: 1, 64>}, {pipeline_mode = #tpu.pipeline_mode<synchronous>, transform_indices = @transform_3, window_bounds = array<i64: 64, 48>}, {pipeline_mode = #tpu.pipeline_mode<synchronous>, transform_indices = @transform_4, window_bounds = array<i64: 1, 48>}, {pipeline_mode = #tpu.pipeline_mode<synchronous>, transform_indices = @transform_5, window_bounds = array<i64: 48, 16>}, {pipeline_mode = #tpu.pipeline_mode<synchronous>, transform_indices = @transform_6, window_bounds = array<i64: 1, 16>}, {transform_indices = @transform_7, window_bounds = array<i64: 8, 16>}]} {
    %c0 = arith.constant 0 : index
    %c0_0 = arith.constant 0 : index
    %0 = vector.load %arg1[%c0, %c0_0] : memref<8x32xf32, #tpu.memory_space<vmem>>, vector<8x32xf32>
    %c0_1 = arith.constant 0 : index
    %c0_2 = arith.constant 0 : index
    %1 = vector.load %arg2[%c0_1, %c0_2] : memref<32x64xf32, #tpu.memory_space<vmem>>, vector<32x64xf32>
    %cst = arith.constant dense<0.000000e+00> : vector<8x64xf32>
    %2 = tpu.matmul %0, %1, %cst {dimension_numbers = #tpu.dot_dimension_numbers<[1], [0], [0], [1], [0, 0, 1, 1], [], []>} : vector<8x32xf32>, vector<32x64xf32>, vector<8x64xf32> -> vector<8x64xf32>
    %c0_3 = arith.constant 0 : index
    %c0_4 = arith.constant 0 : index
    %3 = vector.load %arg3[%c0_3, %c0_4] : memref<1x64xf32, #tpu.memory_space<vmem>>, vector<1x64xf32>
    %4 = vector.broadcast %3 : vector<1x64xf32> to vector<8x64xf32>
    %5 = arith.addf %2, %4 : vector<8x64xf32>
    %cst_5 = arith.constant 0.000000e+00 : f32
    %6 = vector.broadcast %cst_5 : f32 to vector<8x64xf32>
    %7 = arith.maximumf %5, %6 : vector<8x64xf32>
    %c0_6 = arith.constant 0 : index
    %c0_7 = arith.constant 0 : index
    %8 = vector.load %arg4[%c0_6, %c0_7] : memref<64x48xf32, #tpu.memory_space<vmem>>, vector<64x48xf32>
    %cst_8 = arith.constant dense<0.000000e+00> : vector<8x48xf32>
    %9 = tpu.matmul %7, %8, %cst_8 {dimension_numbers = #tpu.dot_dimension_numbers<[1], [0], [0], [1], [0, 0, 1, 1], [], []>} : vector<8x64xf32>, vector<64x48xf32>, vector<8x48xf32> -> vector<8x48xf32>
    %c0_9 = arith.constant 0 : index
    %c0_10 = arith.constant 0 : index
    %10 = vector.load %arg5[%c0_9, %c0_10] : memref<1x48xf32, #tpu.memory_space<vmem>>, vector<1x48xf32>
    %11 = vector.broadcast %10 : vector<1x48xf32> to vector<8x48xf32>
    %12 = arith.addf %9, %11 : vector<8x48xf32>
    %cst_11 = arith.constant 0.000000e+00 : f32
    %13 = vector.broadcast %cst_11 : f32 to vector<8x48xf32>
    %14 = arith.maximumf %12, %13 : vector<8x48xf32>
    %c0_12 = arith.constant 0 : index
    %c0_13 = arith.constant 0 : index
    %15 = vector.load %arg6[%c0_12, %c0_13] : memref<48x16xf32, #tpu.memory_space<vmem>>, vector<48x16xf32>
    %cst_14 = arith.constant dense<0.000000e+00> : vector<8x16xf32>
    %16 = tpu.matmul %14, %15, %cst_14 {dimension_numbers = #tpu.dot_dimension_numbers<[1], [0], [0], [1], [0, 0, 1, 1], [], []>} : vector<8x48xf32>, vector<48x16xf32>, vector<8x16xf32> -> vector<8x16xf32>
    %c0_15 = arith.constant 0 : index
    %c0_16 = arith.constant 0 : index
    %17 = vector.load %arg7[%c0_15, %c0_16] : memref<1x16xf32, #tpu.memory_space<vmem>>, vector<1x16xf32>
    %18 = vector.broadcast %17 : vector<1x16xf32> to vector<8x16xf32>
    %19 = arith.addf %16, %18 : vector<8x16xf32>
    %c0_17 = arith.constant 0 : index
    %c0_18 = arith.constant 0 : index
    %20 = vector.load %arg8[%c0_17, %c0_18] : memref<8x16xf32, #tpu.memory_space<vmem>>, vector<8x16xf32>
    tpu.vector_store %arg8[%c0_17, %c0_18], %19 {strides = array<i32>} : memref<8x16xf32, #tpu.memory_space<vmem>>, vector<8x16xf32>,
    return
  }
  func.func @transform_0(%arg0: i32) -> (i32, i32) {
    %c0_i32 = arith.constant 0 : i32
    %c0_i32_0 = arith.constant 0 : i32
    return %arg0, %c0_i32 : i32, i32
  }
  func.func @transform_1(%arg0: i32) -> (i32, i32) {
    %c0_i32 = arith.constant 0 : i32
    %c0_i32_0 = arith.constant 0 : i32
    %c0_i32_1 = arith.constant 0 : i32
    return %c0_i32, %c0_i32_0 : i32, i32
  }
  func.func @transform_2(%arg0: i32) -> (i32, i32) {
    %c0_i32 = arith.constant 0 : i32
    %c0_i32_0 = arith.constant 0 : i32
    %c0_i32_1 = arith.constant 0 : i32
    return %c0_i32, %c0_i32_0 : i32, i32
  }
  func.func @transform_3(%arg0: i32) -> (i32, i32) {
    %c0_i32 = arith.constant 0 : i32
    %c0_i32_0 = arith.constant 0 : i32
    %c0_i32_1 = arith.constant 0 : i32
    return %c0_i32, %c0_i32_0 : i32, i32
  }
  func.func @transform_4(%arg0: i32) -> (i32, i32) {
    %c0_i32 = arith.constant 0 : i32
    %c0_i32_0 = arith.constant 0 : i32
    %c0_i32_1 = arith.constant 0 : i32
    return %c0_i32, %c0_i32_0 : i32, i32
  }
  func.func @transform_5(%arg0: i32) -> (i32, i32) {
    %c0_i32 = arith.constant 0 : i32
    %c0_i32_0 = arith.constant 0 : i32
    %c0_i32_1 = arith.constant 0 : i32
    return %c0_i32, %c0_i32_0 : i32, i32
  }
  func.func @transform_6(%arg0: i32) -> (i32, i32) {
    %c0_i32 = arith.constant 0 : i32
    %c0_i32_0 = arith.constant 0 : i32
    %c0_i32_1 = arith.constant 0 : i32
    return %c0_i32, %c0_i32_0 : i32, i32
  }
  func.func @transform_7(%arg0: i32) -> (i32, i32) {
    %c0_i32 = arith.constant 0 : i32
    %c0_i32_0 = arith.constant 0 : i32
    return %arg0, %c0_i32 : i32, i32
  }
}

</mosaic_0001>

<llo_original>
// kernel: tpu_custom_call.1
$region0: #{tpu_custom_call.1}
  #allocation0 [shape = 'u32[]', space=smem, size = 0x4, offset = 0x4, fixed_abs, tag = 'smem constant byte address 0x4 - core index']
  #allocation1 [shape = 'u32[144,128]{1,0:T(1,128)}', space=vmem, size = 0x12000, scoped, tag = 'internal scratch']
  %s0 = inlined_call_operand.vmem [shape: f32[8,32], index: 0, kind: input, shape index: {}]
  %s1 = inlined_call_operand.vmem [shape: f32[32,64], index: 1, kind: input, shape index: {}]
  %s2 = inlined_call_operand.vmem [shape: f32[1,64], index: 2, kind: input, shape index: {}]
  %s3 = inlined_call_operand.vmem [shape: f32[64,48], index: 3, kind: input, shape index: {}]
  %s4 = inlined_call_operand.vmem [shape: f32[1,48], index: 4, kind: input, shape index: {}]
  %s5 = inlined_call_operand.vmem [shape: f32[48,16], index: 5, kind: input, shape index: {}]
  %s6 = inlined_call_operand.vmem [shape: f32[1,16], index: 6, kind: input, shape index: {}]
  %s7 = inlined_call_operand.hbm [shape: f32[8,16], index: 7, kind: output, shape index: {}]
  %s8 = sld [smem:[#allocation0]]
  $region38: #{tpu_custom_call.1} parent=0
    _
  %s10 = ssub.s32 1, %s8
  %s11 = scalar_select 0, %s10, %s8
  $region1: #{tpu_custom_call.1} parent=0
    #allocation2 [shape = 'u8[4096]{0}', space=vmem, size = 0x1000, scoped, tag = 'output window, operand 0, single buffered']
    #allocation3 [shape = 's32[1]{0}', space=sflag, size = 0x4, scoped, tag = 'scoped memory for tpu_custom_call.1']
    %12 = vsyncpa [#allocation3], 0
    // Predicated region
    $region2: #{tpu_custom_call.1} parent=1 // pred_check
      _
    $region3: #{tpu_custom_call.1} parent=1 // pred_check_branch
      %14 = sbr.rel (0) target = $region5
    $region4: #{tpu_custom_call.1} parent=1 // pred_region
      _
    $region5: #{tpu_custom_call.1} parent=1 // pred_fallthru
      _
    // Predicated region
    $region6: #{tpu_custom_call.1} parent=1 // pred_check
      _
    $region7: #{tpu_custom_call.1} parent=1 // pred_check_branch
      %16 = sbr.rel (0) target = $region9
    $region8: #{tpu_custom_call.1} parent=1 // pred_region
      _
    $region9: #{tpu_custom_call.1} parent=1 // pred_fallthru
      _
    // Predicated region
    $region10: #{tpu_custom_call.1} parent=1 // pred_check
      _
    $region11: #{tpu_custom_call.1} parent=1 // pred_check_branch
      %18 = sbr.rel (0) target = $region13
    $region12: #{tpu_custom_call.1} parent=1 // pred_region
      _
    $region13: #{tpu_custom_call.1} parent=1 // pred_fallthru
      _
    // Predicated region
    $region14: #{tpu_custom_call.1} parent=1 // pred_check
      _
    $region15: #{tpu_custom_call.1} parent=1 // pred_check_branch
      %20 = sbr.rel (0) target = $region17
    $region16: #{tpu_custom_call.1} parent=1 // pred_region
      _
    $region17: #{tpu_custom_call.1} parent=1 // pred_fallthru
      _
    // Predicated region
    $region18: #{tpu_custom_call.1} parent=1 // pred_check
      _
    $region19: #{tpu_custom_call.1} parent=1 // pred_check_branch
      %22 = sbr.rel (0) target = $region21
    $region20: #{tpu_custom_call.1} parent=1 // pred_region
      _
    $region21: #{tpu_custom_call.1} parent=1 // pred_fallthru
      _
    // Predicated region
    $region22: #{tpu_custom_call.1} parent=1 // pred_check
      _
    $region23: #{tpu_custom_call.1} parent=1 // pred_check_branch
      %24 = sbr.rel (0) target = $region25
    $region24: #{tpu_custom_call.1} parent=1 // pred_region
      _
    $region25: #{tpu_custom_call.1} parent=1 // pred_fallthru
      _
    // Predicated region
    $region26: #{tpu_custom_call.1} parent=1 // pred_check
      _
    $region27: #{tpu_custom_call.1} parent=1 // pred_check_branch
      %26 = sbr.rel (0) target = $region29
    $region28: #{tpu_custom_call.1} parent=1 // pred_region
      _
    $region29: #{tpu_custom_call.1} parent=1 // pred_fallthru
      _
    %v27 = vld [vmem:[%s0] sm:$0xff]
    %v28 = vld [vmem:[%s1] sm:$0xff]
    %v29 = vld [vmem:[%s1 + $0x8] sm:$0xff]
    %v30 = vld [vmem:[%s1 + $0x10] sm:$0xff]
    %v31 = vld [vmem:[%s1 + $0x18] sm:$0xff]
    %v32 = vld [vmem:[%s2] sm:$0x1]
    %v34 = vlaneseq
    %v35 = vshrl.u32 %v34, 7
    %v36 = vsub.s32 0, %v35
    %v37 = vrot.slane %v32, %v36
    %vm39 = vcmask 261120
    %v41 = vsel %vm39, %v27, 0
    %43 = vmatprep.subr.mxu0 0.0
    %44 = vmatpush1.msra.mxu0 %v28
    %45 = vmatprep.subr.mxu0 0.0
    %46 = vmatpush1.msra.mxu0 %v29
    %47 = vmatprep.subr.mxu0 0.0
    %48 = vmatpush1.msra.mxu0 %v30
    %49 = vmatprep.subr.mxu0 0.0
    %50 = vmatpush1.msra.mxu0 %v31
    %51 = vmatprep.subr.mxu0 0.0
    %52 = vmatpush1.msra.mxu0 0.0
    %53 = vmatprep.subr.mxu0 0.0
    %54 = vmatpush1.msra.mxu0 0.0
    %55 = vmatprep.subr.mxu0 0.0
    %56 = vmatpush1.msra.mxu0 0.0
    %57 = vmatprep.subr.mxu0 0.0
    %58 = vmatpush1.msra.mxu0 0.0
    %59 = vmatprep.subr.mxu0 0.0
    %60 = vmatpush1.msra.mxu0 0.0
    %61 = vmatprep.subr.mxu0 0.0
    %62 = vmatpush1.msra.mxu0 0.0
    %63 = vmatprep.subr.mxu0 0.0
    %64 = vmatpush1.msra.mxu0 0.0
    %65 = vmatprep.subr.mxu0 0.0
    %66 = vmatpush1.msra.mxu0 0.0
    %67 = vmatprep.subr.mxu0 0.0
    %68 = vmatpush1.msra.mxu0 0.0
    %69 = vmatprep.subr.mxu0 0.0
    %70 = vmatpush1.msra.mxu0 0.0
    %71 = vmatprep.subr.mxu0 0.0
    %72 = vmatpush1.msra.mxu0 0.0
    %73 = vmatprep.subr.mxu0 0.0
    %74 = vmatpush1.msra.mxu0 0.0
    %75 = vmatprep.subr.mxu0 0.0
    %76 = vmatpush1.msra.mxu0 0.0
    %77 = vmatprep.subr.mxu0 0.0
    %78 = vmatpush1.msra.mxu0 0.0
    %79 = vmatprep.subr.mxu0 0.0
    %80 = vmatpush1.msra.mxu0 0.0
    %81 = vmatprep.subr.mxu0 0.0
    %82 = vmatpush1.msra.mxu0 0.0
    %83 = vmatprep.subr.mxu0 0.0
    %84 = vmatpush1.msra.mxu0 0.0
    %85 = vmatprep.subr.mxu0 0.0
    %86 = vmatpush1.msra.mxu0 0.0
    %87 = vmatprep.subr.mxu0 0.0
    %88 = vmatpush1.msra.mxu0 0.0
    %89 = vmatprep.subr.mxu0 0.0
    %90 = vmatpush1.msra.mxu0 0.0
    %91 = vmatprep.subr.mxu0 0.0
    %92 = vmatpush1.msra.mxu0 0.0
    %93 = vmatprep.subr.mxu0 0.0
    %94 = vmatpush1.msra.mxu0 0.0
    %95 = vmatprep.subr.mxu0 0.0
    %96 = vmatpush1.msra.mxu0 0.0
    %97 = vmatprep.subr.mxu0 0.0
    %98 = vmatpush1.msra.mxu0 0.0
    %99 = vmatprep.subr.mxu0 0.0
    %100 = vmatpush1.msra.mxu0 0.0
    %101 = vmatprep.subr.mxu0 0.0
    %102 = vmatpush1.msra.mxu0 0.0
    %103 = vmatprep.subr.mxu0 0.0
    %104 = vmatpush1.msra.mxu0 0.0
    %105 = vmatprep.subr.mxu0 0.0
    %106 = vmatpush1.msra.mxu0 0.0
    %107 = vmatprep.mubr.f32.mxu0 0.0
    %108 = vmatmul.mubr.f32.gmra.mrb[0].mxu0 %v41
    %v109 = vpop.f32.mrb[0].mxu0
    %v110 = vadd.f32 %v37, %v109
    %v111 = vpop.f32.mrb[0].mxu0
    %112 = vdwg.mxu0
    %v113 = vmax.f32 %v110, 0.0
    %v114 = vld [vmem:[%s3] sm:$0xff]
    %v115 = vld [vmem:[%s3 + $0x8] sm:$0xff]
    %v116 = vld [vmem:[%s3 + $0x10] sm:$0xff]
    %v117 = vld [vmem:[%s3 + $0x18] sm:$0xff]
    %v118 = vld [vmem:[%s3 + $0x20] sm:$0xff]
    %v119 = vld [vmem:[%s3 + $0x28] sm:$0xff]
    %v120 = vld [vmem:[%s3 + $0x30] sm:$0xff]
    %v121 = vld [vmem:[%s3 + $0x38] sm:$0xff]
    %v122 = vld [vmem:[%s4] sm:$0x1]
    %v124 = vlaneseq
    %v125 = vshrl.u32 %v124, 7
    %v126 = vsub.s32 0, %v125
    %v127 = vrot.slane %v122, %v126
    %vm129 = vcmask 523264
    %v131 = vsel %vm129, %v113, 0
    %133 = vmatprep.subr.mxu0 0.0
    %134 = vmatpush1.msra.mxu0 %v114
    %135 = vmatprep.subr.mxu0 0.0
    %136 = vmatpush1.msra.mxu0 %v115
    %137 = vmatprep.subr.mxu0 0.0
    %138 = vmatpush1.msra.mxu0 %v116
    %139 = vmatprep.subr.mxu0 0.0
    %140 = vmatpush1.msra.mxu0 %v117
    %141 = vmatprep.subr.mxu0 0.0
    %142 = vmatpush1.msra.mxu0 %v118
    %143 = vmatprep.subr.mxu0 0.0
    %144 = vmatpush1.msra.mxu0 %v119
    %145 = vmatprep.subr.mxu0 0.0
    %146 = vmatpush1.msra.mxu0 %v120
    %147 = vmatprep.subr.mxu0 0.0
    %148 = vmatpush1.msra.mxu0 %v121
    %149 = vmatprep.subr.mxu0 0.0
    %150 = vmatpush1.msra.mxu0 0.0
    %151 = vmatprep.subr.mxu0 0.0
    %152 = vmatpush1.msra.mxu0 0.0
    %153 = vmatprep.subr.mxu0 0.0
    %154 = vmatpush1.msra.mxu0 0.0
    %155 = vmatprep.subr.mxu0 0.0
    %156 = vmatpush1.msra.mxu0 0.0
    %157 = vmatprep.subr.mxu0 0.0
    %158 = vmatpush1.msra.mxu0 0.0
    %159 = vmatprep.subr.mxu0 0.0
    %160 = vmatpush1.msra.mxu0 0.0
    %161 = vmatprep.subr.mxu0 0.0
    %162 = vmatpush1.msra.mxu0 0.0
    %163 = vmatprep.subr.mxu0 0.0
    %164 = vmatpush1.msra.mxu0 0.0
    %165 = vmatprep.subr.mxu0 0.0
    %166 = vmatpush1.msra.mxu0 0.0
    %167 = vmatprep.subr.mxu0 0.0
    %168 = vmatpush1.msra.mxu0 0.0
    %169 = vmatprep.subr.mxu0 0.0
    %170 = vmatpush1.msra.mxu0 0.0
    %171 = vmatprep.subr.mxu0 0.0
    %172 = vmatpush1.msra.mxu0 0.0
    %173 = vmatprep.subr.mxu0 0.0
    %174 = vmatpush1.msra.mxu0 0.0
    %175 = vmatprep.subr.mxu0 0.0
    %176 = vmatpush1.msra.mxu0 0.0
    %177 = vmatprep.subr.mxu0 0.0
    %178 = vmatpush1.msra.mxu0 0.0
    %179 = vmatprep.subr.mxu0 0.0
    %180 = vmatpush1.msra.mxu0 0.0
    %181 = vmatprep.subr.mxu0 0.0
    %182 = vmatpush1.msra.mxu0 0.0
    %183 = vmatprep.subr.mxu0 0.0
    %184 = vmatpush1.msra.mxu0 0.0
    %185 = vmatprep.subr.mxu0 0.0
    %186 = vmatpush1.msra.mxu0 0.0
    %187 = vmatprep.subr.mxu0 0.0
    %188 = vmatpush1.msra.mxu0 0.0
    %189 = vmatprep.subr.mxu0 0.0
    %190 = vmatpush1.msra.mxu0 0.0
    %191 = vmatprep.subr.mxu0 0.0
    %192 = vmatpush1.msra.mxu0 0.0
    %193 = vmatprep.subr.mxu0 0.0
    %194 = vmatpush1.msra.mxu0 0.0
    %195 = vmatprep.subr.mxu0 0.0
    %196 = vmatpush1.msra.mxu0 0.0
    %197 = vmatprep.mubr.f32.mxu0 0.0
    %198 = vmatmul.mubr.f32.gmra.mrb[0].mxu0 %v131
    %v199 = vpop.f32.mrb[0].mxu0
    %v200 = vadd.f32 %v127, %v199
    %v201 = vpop.f32.mrb[0].mxu0
    %202 = vdwg.mxu0
    %v203 = vmax.f32 %v200, 0.0
    %v204 = vld [vmem:[%s5] sm:$0xff]
    %v205 = vld [vmem:[%s5 + $0x8] sm:$0xff]
    %v206 = vld [vmem:[%s5 + $0x10] sm:$0xff]
    %v207 = vld [vmem:[%s5 + $0x18] sm:$0xff]
    %v208 = vld [vmem:[%s5 + $0x20] sm:$0xff]
    %v209 = vld [vmem:[%s5 + $0x28] sm:$0xff]
    %v210 = vld [vmem:[%s6] sm:$0x1]
    %v212 = vlaneseq
    %v213 = vshrl.u32 %v212, 7
    %v214 = vsub.s32 0, %v213
    %v215 = vrot.slane %v210, %v214
    %vm217 = vcmask 392192
    %v219 = vsel %vm217, %v203, 0
    %221 = vmatprep.subr.mxu0 0.0
    %222 = vmatpush1.msra.mxu0 %v204
    %223 = vmatprep.subr.mxu0 0.0
    %224 = vmatpush1.msra.mxu0 %v205
    %225 = vmatprep.subr.mxu0 0.0
    %226 = vmatpush1.msra.mxu0 %v206
    %227 = vmatprep.subr.mxu0 0.0
    %228 = vmatpush1.msra.mxu0 %v207
    %229 = vmatprep.subr.mxu0 0.0
    %230 = vmatpush1.msra.mxu0 %v208
    %231 = vmatprep.subr.mxu0 0.0
    %232 = vmatpush1.msra.mxu0 %v209
    %233 = vmatprep.subr.mxu0 0.0
    %234 = vmatpush1.msra.mxu0 0.0
    %235 = vmatprep.subr.mxu0 0.0
    %236 = vmatpush1.msra.mxu0 0.0
    %237 = vmatprep.subr.mxu0 0.0
    %238 = vmatpush1.msra.mxu0 0.0
    %239 = vmatprep.subr.mxu0 0.0
    %240 = vmatpush1.msra.mxu0 0.0
    %241 = vmatprep.subr.mxu0 0.0
    %242 = vmatpush1.msra.mxu0 0.0
    %243 = vmatprep.subr.mxu0 0.0
    %244 = vmatpush1.msra.mxu0 0.0
    %245 = vmatprep.subr.mxu0 0.0
    %246 = vmatpush1.msra.mxu0 0.0
    %247 = vmatprep.subr.mxu0 0.0
    %248 = vmatpush1.msra.mxu0 0.0
    %249 = vmatprep.subr.mxu0 0.0
    %250 = vmatpush1.msra.mxu0 0.0
    %251 = vmatprep.subr.mxu0 0.0
    %252 = vmatpush1.msra.mxu0 0.0
    %253 = vmatprep.subr.mxu0 0.0
    %254 = vmatpush1.msra.mxu0 0.0
    %255 = vmatprep.subr.mxu0 0.0
    %256 = vmatpush1.msra.mxu0 0.0
    %257 = vmatprep.subr.mxu0 0.0
    %258 = vmatpush1.msra.mxu0 0.0
    %259 = vmatprep.subr.mxu0 0.0
    %260 = vmatpush1.msra.mxu0 0.0
    %261 = vmatprep.subr.mxu0 0.0
    %262 = vmatpush1.msra.mxu0 0.0
    %263 = vmatprep.subr.mxu0 0.0
    %264 = vmatpush1.msra.mxu0 0.0
    %265 = vmatprep.subr.mxu0 0.0
    %266 = vmatpush1.msra.mxu0 0.0
    %267 = vmatprep.subr.mxu0 0.0
    %268 = vmatpush1.msra.mxu0 0.0
    %269 = vmatprep.subr.mxu0 0.0
    %270 = vmatpush1.msra.mxu0 0.0
    %271 = vmatprep.subr.mxu0 0.0
    %272 = vmatpush1.msra.mxu0 0.0
    %273 = vmatprep.subr.mxu0 0.0
    %274 = vmatpush1.msra.mxu0 0.0
    %275 = vmatprep.subr.mxu0 0.0
    %276 = vmatpush1.msra.mxu0 0.0
    %277 = vmatprep.subr.mxu0 0.0
    %278 = vmatpush1.msra.mxu0 0.0
    %279 = vmatprep.subr.mxu0 0.0
    %280 = vmatpush1.msra.mxu0 0.0
    %281 = vmatprep.subr.mxu0 0.0
    %282 = vmatpush1.msra.mxu0 0.0
    %283 = vmatprep.subr.mxu0 0.0
    %284 = vmatpush1.msra.mxu0 0.0
    %285 = vmatprep.mubr.f32.mxu0 0.0
    %286 = vmatmul.mubr.f32.gmra.mrb[0].mxu0 %v219
    %v287 = vpop.f32.mrb[0].mxu0
    %v288 = vadd.f32 %v215, %v287
    %v289 = vpop.f32.mrb[0].mxu0
    %290 = vdwg.mxu0
    %vm291 = vcmask 130048
    %292 = vst.msk [vmem:[#allocation2] sm:$0xff] %vm291, %v288
    // Predicated region
    $region30: #{tpu_custom_call.1} parent=1 // pred_check
      _
    $region31: #{tpu_custom_call.1} parent=1 // pred_check_branch
      %294 = sbr.rel (0) target = $region33
    $region32: #{tpu_custom_call.1} parent=1 // pred_region
      %s296 = ssub.s32 128, 128
      %297 = vsyncadd [#allocation3], %s296
      %s299 = sshll.u32 [#allocation2], 4
      %s300 = int_to_ptr.vmem [resolvable:$true] %s299
      %302 = dma.vmem_to_hbm [thread:$0]  %s300, 128, %s7, [#allocation3]
    $region33: #{tpu_custom_call.1} parent=1 // pred_fallthru
      _
    // Predicated region
    $region34: #{tpu_custom_call.1} parent=1 // pred_check
      _
    $region35: #{tpu_custom_call.1} parent=1 // pred_check_branch
      %304 = sbr.rel (0) target = $region37
    $region36: #{tpu_custom_call.1} parent=1 // pred_region
      %305 = dma.done [#allocation3], 128
    $region37: #{tpu_custom_call.1} parent=1 // pred_fallthru
      _
    %306 = vsyncpa [#allocation3], 1

</llo_original>
